<compile_context>
chip_gen: v5e
topology: v5e:2x2
jax: 0.10.0
libtpu: 0.0.40
codegen_flags: <defaults>
</compile_context>

<pallas_src>
import math

import jax
import jax.numpy as jnp
from jax.experimental import pallas as pl
from jax.experimental.pallas import tpu as pltpu

_NEG_INF = -1e30


# ----------------------------------------------------------------------------------
# Pallas kernel
# ----------------------------------------------------------------------------------
def _moe_expert_kernel(x_ref, w1_ref, b1_ref, w2_ref, b2_ref, g_ref,
                       bbc_ref, bsum_ref, comb_ref, out_ref, acc_ref):
    """One group of G experts per grid step, everything in a packed lane-dense layout.

    Grid = (batch_tiles ["parallel"], expert_groups ["arbitrary"]).  The f32 accumulator
    lives in VMEM scratch across the group axis; the lane-dense padded output block is
    stored exactly once per batch tile (unmasked vst).
    """
    eg = pl.program_id(1)
    ng = pl.num_programs(1)
    G, GOp = bbc_ref.shape            # experts per group, padded packed fc2 width
    Op = GOp // G                     # per-expert padded output width
    tB = x_ref.shape[0]
    E = g_ref.shape[1]

    @pl.when(eg == 0)
    def _():
        acc_ref[...] = jnp.zeros_like(acc_ref)

    # ---- fc1 for the WHOLE group: one lane-dense bf16 MXU matmul, f32 accumulation.
    h = jnp.dot(x_ref[...], w1_ref[...], preferred_element_type=jnp.float32)
    h = jnp.maximum(h + b1_ref[...], 0.0)                                # [tB, G*H] f32

    # ---- fc2 for the WHOLE group: block-diagonal packed weights -> one MXU pass.
    # Padded logit columns carry bias -1e30 so they receive zero probability mass.
    logits = jnp.dot(h.astype(w2_ref.dtype), w2_ref[0],
                     preferred_element_type=jnp.float32) + b2_ref[0]     # [tB, G*Op]

    # ---- per-expert softmax in the packed lane layout.
    m_blk = jnp.max(logits.reshape(tB, G, Op), axis=-1)                  # [tB, G]
    m_bc = jnp.dot(m_blk, bbc_ref[...], preferred_element_type=jnp.float32)
    e = jnp.exp(logits - m_bc)                                           # [tB, G*Op]
    denom = jnp.dot(e, bsum_ref[...], preferred_element_type=jnp.float32)  # [tB, G], >= 1

    # ---- gate weighting + combine over the group's experts, on the MXU.
    if G == E:
        gates_g = g_ref[...]
    else:
        gates_g = g_ref[:, pl.ds(eg * G, G)]
    scale = gates_g * pl.reciprocal(denom, approx=True)                  # [tB, G]
    weighted = e * jnp.dot(scale, bbc_ref[...], preferred_element_type=jnp.float32)
    acc_ref[...] += jnp.dot(weighted, comb_ref[...],
                            preferred_element_type=jnp.float32)          # [tB, O_pad]

    @pl.when(eg == ng - 1)
    def _():
        out_ref[...] = acc_ref[...]                                      # single lane-dense store


# ----------------------------------------------------------------------------------
# Wrapper: one-time packing (layout plumbing) + pallas_call
# ----------------------------------------------------------------------------------
def _round_up(x, m):
    return (x + m - 1) // m * m


def _pick_batch_block(B):
    # Prefer >= 2 batch tiles (keeps both v7x TensorCores busy via the "parallel" axis),
    # 16-row aligned for bf16 sublane packing.
    for tb in (256, 128, 64, 32, 16):
        if B % tb == 0 and B // tb >= 2:
            return tb
    return B


def moe_experts(x, W1, b1, W2, b2, gates, *, expert_block=None, batch_block=None,
                weight_dtype=jnp.bfloat16):
    """y[b] = sum_e gates[b,e] * softmax(fc2_e(relu(fc1_e(x[b]))))."""
    B, In = x.shape
    E, _, H = W1.shape
    O = W2.shape[2]
    f32 = jnp.float32

    # Experts per grid step.  At the demo sizes everything fits VMEM, so one group.
    G = E if expert_block is None else expert_block
    assert E % G == 0, "expert_block must divide num_experts"
    ng = E // G
    if ng > 1:
        # Relaxed: only the lane dim of the sliced fc1 blocks needs 128-alignment.
        assert (G * H) % 128 == 0, "pick expert_block so expert_block*hidden % 128 == 0"
    # TODO(synk): for very large In/H, add an extra "arbitrary" contraction grid axis and
    # re-derive the weight-tile budget per generation (v7x has only 64 MiB VMEM).

    # Per-expert padded fc2 width so packed logits are lane-dense (G*Op % 128 == 0).
    step = 128 // math.gcd(G, 128)
    Op = _round_up(max(O, 1), step)
    GOp = G * Op
    O_pad = _round_up(max(O, 128), 128)   # lane-dense output store; sliced back below

    tB = _pick_batch_block(B) if batch_block is None else batch_block
    assert B % tB == 0
    nb = B // tB

    # ---- one-time host-side packing (outside the hot loop) --------------------------
    x_lp = x.astype(weight_dtype)                       # halve x DMA bytes, no per-step cast
    W1p = jnp.transpose(W1, (1, 0, 2)).reshape(In, E * H).astype(weight_dtype)
    b1p = b1.reshape(1, E * H).astype(f32)

    # Block-diagonal fc2 weights per group [ng, G*H, G*Op]; bias padded with -1e30 so the
    # padded logit columns get zero softmax mass.
    W2g = W2.reshape(ng, G, H, O).astype(f32)
    b2g = b2.reshape(ng, G, O).astype(f32)
    W2bd = jnp.zeros((ng, G * H, GOp), f32)
    b2p = jnp.full((ng, 1, GOp), _NEG_INF, f32)
    for g in range(G):
        W2bd = W2bd.at[:, g * H:(g + 1) * H, g * Op:g * Op + O].set(W2g[:, g])
        b2p = b2p.at[:, 0, g * Op:g * Op + O].set(b2g[:, g])
    W2bd = W2bd.astype(weight_dtype)
    # TODO(synk): optional weight quantization (fp8 on v7x, int8 on v5e/v6e) with
    # per-channel scales applied post-accumulation would halve weight HBM traffic.

    # Constant 0/1 block-structure matrices (stay VMEM-resident; index_map is constant).
    gi = jnp.arange(GOp) // Op
    oi = jnp.arange(GOp) % Op
    valid = (oi < O).astype(f32)
    blk_bc = jax.nn.one_hot(gi, G, dtype=f32).T * valid[None, :]     # [G, G*Op] broadcast map
    blk_sum = blk_bc.T                                               # [G*Op, G] block-sum map
    comb = jax.nn.one_hot(oi, O_pad, dtype=f32) * valid[:, None]     # [G*Op, O_pad] combine map

    y_pad = pl.pallas_call(
        _moe_expert_kernel,
        out_shape=jax.ShapeDtypeStruct((B, O_pad), f32),
        grid_spec=pltpu.PrefetchScalarGridSpec(
            num_scalar_prefetch=0,
            grid=(nb, ng),
            in_specs=[
                pl.BlockSpec((tB, In), lambda bi, eg: (bi, 0)),            # x (bf16)
                pl.BlockSpec((In, G * H), lambda bi, eg: (0, eg)),         # packed fc1 W (bf16)
                pl.BlockSpec((1, G * H), lambda bi, eg: (0, eg)),          # packed fc1 bias
                pl.BlockSpec((1, G * H, GOp), lambda bi, eg: (eg, 0, 0)),  # block-diag fc2 W (bf16)
                pl.BlockSpec((1, 1, GOp), lambda bi, eg: (eg, 0, 0)),      # fc2 bias (pad=-1e30)
                pl.BlockSpec((tB, E), lambda bi, eg: (bi, 0)),             # gates (resident)
                pl.BlockSpec((G, GOp), lambda bi, eg: (0, 0)),             # block broadcast map
                pl.BlockSpec((GOp, G), lambda bi, eg: (0, 0)),             # block sum map
                pl.BlockSpec((GOp, O_pad), lambda bi, eg: (0, 0)),         # expert combine map
            ],
            out_specs=pl.BlockSpec((tB, O_pad), lambda bi, eg: (bi, 0)),
            scratch_shapes=[pltpu.VMEM((tB, O_pad), f32)],
        ),
        compiler_params=pltpu.CompilerParams(
            dimension_semantics=("parallel", "arbitrary"),
            # Explicit scoped-VMEM limit (v5e default is only 16 MiB); 48 MiB is safe on
            # v5e/v6e (128 MiB physical) and leaves headroom on v7x (64 MiB physical).
            vmem_limit_bytes=48 * 1024 * 1024,
        ),
        # TODO(synk): when num_groups > 1 and batch is decode-sized, pipeline_mode=
        # pl.Buffered(3) on the W1p/W2bd specs hides weight-stream DMA on v5e/v6e.
    )(x_lp, W1p, b1p, W2bd, b2p, gates.astype(f32), blk_bc, blk_sum, comb)
    return y_pad[:, :O]


# ----------------------------------------------------------------------------------
# JAX glue (gating top-k / scatter / load-balancing loss — small, data-dependent)
# ----------------------------------------------------------------------------------
def cv_squared(v):
    eps = 1e-10
    if v.shape[0] == 1:
        return jnp.zeros((), v.dtype)
    v = v.astype(jnp.float32)
    return jnp.var(v, ddof=1) / (jnp.mean(v) ** 2 + eps)   # torch .var() is unbiased


def _prob_in_top_k(clean, noisy, noise_std, top_values, k):
    thr_in = top_values[:, k:k + 1]       # (k+1)-th largest value (m = k+1 columns)
    thr_out = top_values[:, k - 1:k]
    is_in = noisy > thr_in
    prob_in = jax.scipy.stats.norm.cdf((clean - thr_in) / noise_std)
    prob_out = jax.scipy.stats.norm.cdf((clean - thr_out) / noise_std)
    return jnp.where(is_in, prob_in, prob_out)


def noisy_top_k_gating(x, params, noise_key, train, k, num_experts,
                       noisy_gating=True, noise_epsilon=0.01):
    # Tiny [B,In]@[In,E] gating matmuls stay in plain XLA (a dedicated Pallas launch
    # costs more than the compute at these sizes); f32 keeps top-k selection identical.
    clean_logits = jnp.dot(x, params["w_gate"])
    if noisy_gating and train:
        raw_noise = jnp.dot(x, params["w_noise"])
        noise_std = jax.nn.softplus(raw_noise) + noise_epsilon
        noisy_logits = clean_logits + jax.random.normal(noise_key, clean_logits.shape) * noise_std
        logits = noisy_logits
    else:
        noise_std = None
        noisy_logits = clean_logits
        logits = clean_logits

    logits = jax.nn.softmax(logits, axis=1)
    m = min(k + 1, num_experts)
    top_logits, top_indices = jax.lax.top_k(logits, m)
    top_k_logits = top_logits[:, :k]
    top_k_indices = top_indices[:, :k]
    top_k_gates = top_k_logits / (jnp.sum(top_k_logits, axis=1, keepdims=True) + 1e-6)

    rows = jnp.arange(x.shape[0])[:, None]
    gates = jnp.zeros_like(logits).at[rows, top_k_indices].set(top_k_gates)

    if noisy_gating and k < num_experts and train:
        load = _prob_in_top_k(clean_logits, noisy_logits, noise_std, top_logits, k).sum(0)
    else:
        load = (gates > 0).sum(0).astype(jnp.float32)
    return gates, load


def moe_forward(x, params, noise_key, train, k, loss_coef=0.01):
    num_experts = params["W1"].shape[0]
    gates, load = noisy_top_k_gating(x, params, noise_key, train, k, num_experts)
    importance = gates.sum(0)
    loss = (cv_squared(importance) + cv_squared(load)) * loss_coef
    y = moe_experts(x, params["W1"], params["b1"], params["W2"], params["b2"], gates)
    return y, loss, gates


# ----------------------------------------------------------------------------------
# Deterministic parameter init (shapes from MoE.__init__; values random-but-fixed so
# the gating is non-degenerate — torch inits w_gate/w_noise to zeros).
# ----------------------------------------------------------------------------------
def init_params(key, input_size, output_size, hidden_size, num_experts, scale=0.1):
    ks = jax.random.split(key, 6)
    f32 = jnp.float32
    return dict(
        w_gate=scale * jax.random.normal(ks[0], (input_size, num_experts), f32),
        w_noise=scale * jax.random.normal(ks[1], (input_size, num_experts), f32),
        W1=scale * jax.random.normal(ks[2], (num_experts, input_size, hidden_size), f32),
        b1=scale * jax.random.normal(ks[3], (num_experts, hidden_size), f32),
        W2=scale * jax.random.normal(ks[4], (num_experts, hidden_size, output_size), f32),
        b2=scale * jax.random.normal(ks[5], (num_experts, output_size), f32),
    )


def _ref_experts(x, params, gates, weight_dtype=jnp.bfloat16):
    """Pure-JAX dense reference of the expert hot path (same gates, same bf16 casts)."""
    W1 = params["W1"].astype(weight_dtype)
    W2 = params["W2"].astype(weight_dtype)
    xw = x.astype(weight_dtype)
    h = jnp.einsum("bi,eih->ebh", xw, W1, preferred_element_type=jnp.float32)
    h = jnp.maximum(h + params["b1"][:, None, :], 0.0)
    logits = jnp.einsum("ebh,eho->ebo", h.astype(weight_dtype), W2,
                        preferred_element_type=jnp.float32) + params["b2"][:, None, :]
    p = jax.nn.softmax(logits, axis=-1)
    return jnp.einsum("ebo,be->bo", p, gates)


if __name__ == "__main__":
    B, IN, OUT, HID, E, K = 32, 32, 16, 32, 8, 4
    key = jax.random.PRNGKey(0)
    kx, kp, kn = jax.random.split(key, 3)

    params = init_params(kp, IN, OUT, HID, E)
    x = jax.random.normal(kx, (B, IN), jnp.float32)

    # module default is training=True; noise comes from a fixed JAX PRNG key
    # (torch.randn_like is RNG-backend specific, so exact noise values differ by design).
    y, loss, gates = moe_forward(x, params, noise_key=kn, train=True, k=K, loss_coef=0.01)
    jax.block_until_ready((y, loss))

    y_ref = _ref_experts(x, params, gates)
    err = float(jnp.max(jnp.abs(y - y_ref)))
    assert err < 2e-2, f"mismatch vs reference: {err}"
    assert y.shape == (B, OUT) and loss.shape == ()

    print("KERNEL_OK")
</pallas_src>

<mosaic_0001>
module attributes {stable_mosaic.version = 11 : i64} {
  func.func @_moe_expert_kernel(%arg0: i32, %arg1: i32, %arg2: memref<16x32xbf16, #tpu.memory_space<vmem>>, %arg3: memref<32x256xbf16, #tpu.memory_space<vmem>>, %arg4: memref<1x256xf32, #tpu.memory_space<vmem>>, %arg5: memref<1x256x128xbf16, #tpu.memory_space<vmem>>, %arg6: memref<1x1x128xf32, #tpu.memory_space<vmem>>, %arg7: memref<16x8xf32, #tpu.memory_space<vmem>>, %arg8: memref<8x128xf32, #tpu.memory_space<vmem>>, %arg9: memref<128x8xf32, #tpu.memory_space<vmem>>, %arg10: memref<128x128xf32, #tpu.memory_space<vmem>>, %arg11: memref<16x128xf32, #tpu.memory_space<vmem>>, %arg12: memref<16x128xf32, #tpu.memory_space<vmem>>) attributes {dimension_semantics = [#tpu.dimension_semantics<parallel>, #tpu.dimension_semantics<arbitrary>], iteration_bounds = array<i64: 2, 1>, scalar_prefetch = 0 : i64, scratch_operands = 1 : i64, tpu.core_type = #tpu.core_type<tc>, window_params = [{transform_indices = @transform_0, window_bounds = array<i64: 16, 32>}, {transform_indices = @transform_1, window_bounds = array<i64: 32, 256>}, {transform_indices = @transform_2, window_bounds = array<i64: 1, 256>}, {transform_indices = @transform_3, window_bounds = array<i64: 1, 256, 128>}, {transform_indices = @transform_4, window_bounds = array<i64: 1, 1, 128>}, {transform_indices = @transform_5, window_bounds = array<i64: 16, 8>}, {pipeline_mode = #tpu.pipeline_mode<synchronous>, transform_indices = @transform_6, window_bounds = array<i64: 8, 128>}, {pipeline_mode = #tpu.pipeline_mode<synchronous>, transform_indices = @transform_7, window_bounds = array<i64: 128, 8>}, {pipeline_mode = #tpu.pipeline_mode<synchronous>, transform_indices = @transform_8, window_bounds = array<i64: 128, 128>}, {transform_indices = @transform_9, window_bounds = array<i64: 16, 128>}]} {
    %c0_i32 = arith.constant 0 : i32
    %0 = arith.cmpi eq, %arg1, %c0_i32 : i32
    %1 = arith.extui %0 : i1 to i32
    %c0_i32_0 = arith.constant 0 : i32
    %2 = arith.cmpi ne, %1, %c0_i32_0 : i32
    scf.if %2 {
      %cst_35 = arith.constant 0.000000e+00 : f32
      %41 = vector.broadcast %cst_35 : f32 to vector<16x128xf32>
      %c0_36 = arith.constant 0 : index
      %c0_37 = arith.constant 0 : index
      %42 = vector.load %arg12[%c0_36, %c0_37] : memref<16x128xf32, #tpu.memory_space<vmem>>, vector<16x128xf32>
      tpu.vector_store %arg12[%c0_36, %c0_37], %41 {strides = array<i32>} : memref<16x128xf32, #tpu.memory_space<vmem>>, vector<16x128xf32>,
    } else {
    }
    %c0 = arith.constant 0 : index
    %c0_1 = arith.constant 0 : index
    %3 = vector.load %arg2[%c0, %c0_1] : memref<16x32xbf16, #tpu.memory_space<vmem>>, vector<16x32xbf16>
    %c0_2 = arith.constant 0 : index
    %c0_3 = arith.constant 0 : index
    %4 = vector.load %arg3[%c0_2, %c0_3] : memref<32x256xbf16, #tpu.memory_space<vmem>>, vector<32x256xbf16>
    %cst = arith.constant dense<0.000000e+00> : vector<16x256xf32>
    %5 = tpu.matmul %3, %4, %cst {dimension_numbers = #tpu.dot_dimension_numbers<[1], [0], [0], [1], [0, 0, 1, 1], [], []>} : vector<16x32xbf16>, vector<32x256xbf16>, vector<16x256xf32> -> vector<16x256xf32>
    %c0_4 = arith.constant 0 : index
    %c0_5 = arith.constant 0 : index
    %6 = vector.load %arg4[%c0_4, %c0_5] : memref<1x256xf32, #tpu.memory_space<vmem>>, vector<1x256xf32>
    %7 = vector.broadcast %6 : vector<1x256xf32> to vector<16x256xf32>
    %8 = arith.addf %5, %7 : vector<16x256xf32>
    %cst_6 = arith.constant 0.000000e+00 : f32
    %9 = vector.broadcast %cst_6 : f32 to vector<16x256xf32>
    %10 = arith.maximumf %8, %9 : vector<16x256xf32>
    %11 = arith.truncf %10 : vector<16x256xf32> to vector<16x256xbf16>
    %c0_7 = arith.constant 0 : index
    %c0_8 = arith.constant 0 : index
    %c0_9 = arith.constant 0 : index
    %12 = vector.load %arg5[%c0_7, %c0_8, %c0_9] : memref<1x256x128xbf16, #tpu.memory_space<vmem>>, vector<1x256x128xbf16>
    %13 = vector.shape_cast %12 : vector<1x256x128xbf16> to vector<256x128xbf16>
    %cst_10 = arith.constant dense<0.000000e+00> : vector<16x128xf32>
    %14 = tpu.matmul %11, %13, %cst_10 {dimension_numbers = #tpu.dot_dimension_numbers<[1], [0], [0], [1], [0, 0, 1, 1], [], []>} : vector<16x256xbf16>, vector<256x128xbf16>, vector<16x128xf32> -> vector<16x128xf32>
    %c0_11 = arith.constant 0 : index
    %c0_12 = arith.constant 0 : index
    %c0_13 = arith.constant 0 : index
    %15 = vector.load %arg6[%c0_11, %c0_12, %c0_13] : memref<1x1x128xf32, #tpu.memory_space<vmem>>, vector<1x1x128xf32>
    %16 = vector.shape_cast %15 : vector<1x1x128xf32> to vector<1x128xf32>
    %17 = vector.broadcast %16 : vector<1x128xf32> to vector<16x128xf32>
    %18 = arith.addf %14, %17 : vector<16x128xf32>
    %19 = vector.shape_cast %18 : vector<16x128xf32> to vector<16x8x16xf32>
    %cst_14 = arith.constant dense<0xFF800000> : vector<16x8xf32>
    %20 = vector.multi_reduction <maximumf>, %19, %cst_14 [2] : vector<16x8x16xf32> to vector<16x8xf32>
    %c0_15 = arith.constant 0 : index
    %c0_16 = arith.constant 0 : index
    %21 = vector.load %arg8[%c0_15, %c0_16] : memref<8x128xf32, #tpu.memory_space<vmem>>, vector<8x128xf32>
    %cst_17 = arith.constant dense<0.000000e+00> : vector<16x128xf32>
    %22 = tpu.matmul %20, %21, %cst_17 {dimension_numbers = #tpu.dot_dimension_numbers<[1], [0], [0], [1], [0, 0, 1, 1], [], []>} : vector<16x8xf32>, vector<8x128xf32>, vector<16x128xf32> -> vector<16x128xf32>
    %23 = arith.subf %18, %22 : vector<16x128xf32>
    %24 = math.exp %23 : vector<16x128xf32>
    %c0_18 = arith.constant 0 : index
    %c0_19 = arith.constant 0 : index
    %25 = vector.load %arg9[%c0_18, %c0_19] : memref<128x8xf32, #tpu.memory_space<vmem>>, vector<128x8xf32>
    %cst_20 = arith.constant dense<0.000000e+00> : vector<16x8xf32>
    %26 = tpu.matmul %24, %25, %cst_20 {dimension_numbers = #tpu.dot_dimension_numbers<[1], [0], [0], [1], [0, 0, 1, 1], [], []>} : vector<16x128xf32>, vector<128x8xf32>, vector<16x8xf32> -> vector<16x8xf32>
    %c0_21 = arith.constant 0 : index
    %c0_22 = arith.constant 0 : index
    %27 = vector.load %arg7[%c0_21, %c0_22] : memref<16x8xf32, #tpu.memory_space<vmem>>, vector<16x8xf32>
    %28 = tpu.reciprocal %26 {approx = true} : vector<16x8xf32> -> vector<16x8xf32>
    %29 = arith.mulf %27, %28 : vector<16x8xf32>
    %c0_23 = arith.constant 0 : index
    %c0_24 = arith.constant 0 : index
    %30 = vector.load %arg8[%c0_23, %c0_24] : memref<8x128xf32, #tpu.memory_space<vmem>>, vector<8x128xf32>
    %cst_25 = arith.constant dense<0.000000e+00> : vector<16x128xf32>
    %31 = tpu.matmul %29, %30, %cst_25 {dimension_numbers = #tpu.dot_dimension_numbers<[1], [0], [0], [1], [0, 0, 1, 1], [], []>} : vector<16x8xf32>, vector<8x128xf32>, vector<16x128xf32> -> vector<16x128xf32>
    %32 = arith.mulf %24, %31 : vector<16x128xf32>
    %c0_26 = arith.constant 0 : index
    %c0_27 = arith.constant 0 : index
    %33 = vector.load %arg12[%c0_26, %c0_27] : memref<16x128xf32, #tpu.memory_space<vmem>>, vector<16x128xf32>
    %c0_28 = arith.constant 0 : index
    %c0_29 = arith.constant 0 : index
    %34 = vector.load %arg10[%c0_28, %c0_29] : memref<128x128xf32, #tpu.memory_space<vmem>>, vector<128x128xf32>
    %cst_30 = arith.constant dense<0.000000e+00> : vector<16x128xf32>
    %35 = tpu.matmul %32, %34, %cst_30 {dimension_numbers = #tpu.dot_dimension_numbers<[1], [0], [0], [1], [0, 0, 1, 1], [], []>} : vector<16x128xf32>, vector<128x128xf32>, vector<16x128xf32> -> vector<16x128xf32>
    %36 = arith.addf %33, %35 : vector<16x128xf32>
    %c0_31 = arith.constant 0 : index
    %c0_32 = arith.constant 0 : index
    %37 = vector.load %arg12[%c0_31, %c0_32] : memref<16x128xf32, #tpu.memory_space<vmem>>, vector<16x128xf32>
    tpu.vector_store %arg12[%c0_31, %c0_32], %36 {strides = array<i32>} : memref<16x128xf32, #tpu.memory_space<vmem>>, vector<16x128xf32>,
    %c0_i32_33 = arith.constant 0 : i32
    %38 = arith.cmpi eq, %arg1, %c0_i32_33 : i32
    %39 = arith.extui %38 : i1 to i32
    %c0_i32_34 = arith.constant 0 : i32
    %40 = arith.cmpi ne, %39, %c0_i32_34 : i32
    scf.if %40 {
      %c0_35 = arith.constant 0 : index
      %c0_36 = arith.constant 0 : index
      %41 = vector.load %arg12[%c0_35, %c0_36] : memref<16x128xf32, #tpu.memory_space<vmem>>, vector<16x128xf32>
      %c0_37 = arith.constant 0 : index
      %c0_38 = arith.constant 0 : index
      %42 = vector.load %arg11[%c0_37, %c0_38] : memref<16x128xf32, #tpu.memory_space<vmem>>, vector<16x128xf32>
      tpu.vector_store %arg11[%c0_37, %c0_38], %41 {strides = array<i32>} : memref<16x128xf32, #tpu.memory_space<vmem>>, vector<16x128xf32>,
    } else {
    }
    return
  }
  func.func @transform_0(%arg0: i32, %arg1: i32) -> (i32, i32) {
    %c0_i32 = arith.constant 0 : i32
    %c0_i32_0 = arith.constant 0 : i32
    return %arg0, %c0_i32 : i32, i32
  }
  func.func @transform_1(%arg0: i32, %arg1: i32) -> (i32, i32) {
    %c0_i32 = arith.constant 0 : i32
    %c0_i32_0 = arith.constant 0 : i32
    return %c0_i32, %arg1 : i32, i32
  }
  func.func @transform_2(%arg0: i32, %arg1: i32) -> (i32, i32) {
    %c0_i32 = arith.constant 0 : i32
    %c0_i32_0 = arith.constant 0 : i32
    return %c0_i32, %arg1 : i32, i32
  }
  func.func @transform_3(%arg0: i32, %arg1: i32) -> (i32, i32, i32) {
    %c0_i32 = arith.constant 0 : i32
    %c0_i32_0 = arith.constant 0 : i32
    %c0_i32_1 = arith.constant 0 : i32
    return %arg1, %c0_i32, %c0_i32_0 : i32, i32, i32
  }
  func.func @transform_4(%arg0: i32, %arg1: i32) -> (i32, i32, i32) {
    %c0_i32 = arith.constant 0 : i32
    %c0_i32_0 = arith.constant 0 : i32
    %c0_i32_1 = arith.constant 0 : i32
    return %arg1, %c0_i32, %c0_i32_0 : i32, i32, i32
  }
  func.func @transform_5(%arg0: i32, %arg1: i32) -> (i32, i32) {
    %c0_i32 = arith.constant 0 : i32
    %c0_i32_0 = arith.constant 0 : i32
    return %arg0, %c0_i32 : i32, i32
  }
  func.func @transform_6(%arg0: i32, %arg1: i32) -> (i32, i32) {
    %c0_i32 = arith.constant 0 : i32
    %c0_i32_0 = arith.constant 0 : i32
    %c0_i32_1 = arith.constant 0 : i32
    return %c0_i32, %c0_i32_0 : i32, i32
  }
  func.func @transform_7(%arg0: i32, %arg1: i32) -> (i32, i32) {
    %c0_i32 = arith.constant 0 : i32
    %c0_i32_0 = arith.constant 0 : i32
    %c0_i32_1 = arith.constant 0 : i32
    return %c0_i32, %c0_i32_0 : i32, i32
  }
  func.func @transform_8(%arg0: i32, %arg1: i32) -> (i32, i32) {
    %c0_i32 = arith.constant 0 : i32
    %c0_i32_0 = arith.constant 0 : i32
    %c0_i32_1 = arith.constant 0 : i32
    return %c0_i32, %c0_i32_0 : i32, i32
  }
  func.func @transform_9(%arg0: i32, %arg1: i32) -> (i32, i32) {
    %c0_i32 = arith.constant 0 : i32
    %c0_i32_0 = arith.constant 0 : i32
    return %arg0, %c0_i32 : i32, i32
  }
}

</mosaic_0001>

<llo_original>
// kernel: tpu_custom_call.1
$region0: #{tpu_custom_call.1}
  #allocation0 [shape = 'u32[]', space=smem, size = 0x4, offset = 0x4, fixed_abs, tag = 'smem constant byte address 0x4 - core index']
  #allocation1 [shape = 'u32[72,128]{1,0:T(1,128)}', space=vmem, size = 0x9000, scoped, tag = 'internal scratch']
  #allocation2 [shape = 'f32[16,128]{1,0:T(8,128)}', space=vmem, size = 0x2000, scoped, tag = 'scratch operand']
  %s0 = inlined_call_operand.hbm [shape: bf16[32,32], index: 0, kind: input, shape index: {}]
  %s1 = inlined_call_operand.vmem [shape: bf16[32,256], index: 1, kind: input, shape index: {}]
  %s2 = inlined_call_operand.hbm [shape: f32[1,256], index: 2, kind: input, shape index: {}]
  %s3 = inlined_call_operand.vmem [shape: bf16[1,256,128], index: 3, kind: input, shape index: {}]
  %s4 = inlined_call_operand.vmem [shape: f32[1,1,128], index: 4, kind: input, shape index: {}]
  %s5 = inlined_call_operand.vmem [shape: f32[32,8], index: 5, kind: input, shape index: {}]
  %s6 = inlined_call_operand.vmem [shape: f32[8,128], index: 6, kind: input, shape index: {}]
  %s7 = inlined_call_operand.vmem [shape: f32[128,8], index: 7, kind: input, shape index: {}]
  %s8 = inlined_call_operand.hbm [shape: f32[128,128], index: 8, kind: input, shape index: {}]
  %s9 = inlined_call_operand.hbm [shape: f32[32,128], index: 9, kind: output, shape index: {}]
  %s10 = sld [smem:[#allocation0]]
  $region89: #{tpu_custom_call.1} parent=0
    _
  %s12 = ssub.s32 1, %s10
  %s13 = scalar_select 0, %s12, %s10
  $region1: #{tpu_custom_call.1} parent=0
    #allocation3 [shape = 'u8[8192]{0}', space=vmem, size = 0x2000, scoped, tag = 'input window, operand 0']
    #allocation4 [shape = 's32[2]{0}', space=sflag, size = 0x8, scoped, tag = 'scoped memory for tpu_custom_call.1']
    #allocation5 [shape = 's32[2]{0}', space=sflag, size = 0x8, scoped, tag = 'scoped memory for tpu_custom_call.1']
    #allocation6 [shape = 'u8[1024]{0}', space=vmem, size = 0x400, scoped, tag = 'input window, operand 2, single buffered']
    #allocation7 [shape = 's32[1]{0}', space=sflag, size = 0x4, scoped, tag = 'scoped memory for tpu_custom_call.1']
    #allocation8 [shape = 'u8[65536]{0}', space=vmem, size = 0x10000, scoped, tag = 'input window, operand 8, single buffered']
    #allocation9 [shape = 'u8[16384]{0}', space=vmem, size = 0x4000, scoped, tag = 'output window, operand 0']
    %14 = vsyncpa [#allocation4], 0
    %s15 = scalar_lea.sflag [#allocation4], 1
    %16 = vsyncpa %s15, 0
    %17 = vsyncpa [#allocation7], 0
    %18 = vsyncpa [#allocation5], 0
    %s19 = scalar_lea.sflag [#allocation5], 1
    %20 = vsyncpa %s19, 0
    loop: start=0, step=1, limit=4
    $region2: #{tpu_custom_call.1} parent=1 // loop_pre_header
      _
    $region3: #{tpu_custom_call.1} parent=1 // loop_header
      %s22 = sphi 0, %s26
      %p23 = scmp.ge.s32.totalorder %s22, 4
      %s29 = sphi 0, %s41
      %s30 = sphi 0, %s37
      %s31 = sphi 0, %s29
      %s32 = sphi 0, %s30
      %s33 = sphi 0, %s31
      %s34 = sphi 0, %s32
      %s44 = sphi 0, %s46
      %s47 = sphi 0, %s44
      %s48 = sphi 0, %s47
      %s64 = sphi 0, %s48
      %s70 = sphi 0, %s72
      %s73 = sphi 0, %s70
      %s74 = sphi 0, %s73
      %s90 = sphi 0, %s74
      %s96 = sphi 0, %s98
      %s99 = sphi 0, %s96
      %s100 = sphi 0, %s99
      %s116 = sphi 0, %s100
      %s122 = sphi 0, %s124
      %s125 = sphi 0, %s122
      %s126 = sphi 0, %s125
      %s142 = sphi 0, %s126
      %s148 = sphi 0, %s150
      %s151 = sphi 0, %s148
      %s152 = sphi 0, %s151
      %s168 = sphi 0, %s152
      %s174 = sphi 0, %s176
      %s177 = sphi 0, %s174
      %s178 = sphi 0, %s177
      %s194 = sphi 0, %s178
      %s198 = sphi 0, %s198
      %s200 = sphi 0, %s198
      %s201 = sphi 0, %s200
      %s215 = sphi 0, %s201
      %s219 = sphi 0, %s219
      %s221 = sphi 0, %s219
      %s222 = sphi 0, %s221
      %s236 = sphi 0, %s222
      %s240 = sphi 0, %s240
      %s242 = sphi 0, %s240
      %s243 = sphi 0, %s242
      %s257 = sphi 0, %s243
      %s263 = sphi 0, %s265
      %s266 = sphi 0, %s263
      %s267 = sphi 0, %s266
      %s283 = sphi 0, %s267
    $region4: #{tpu_custom_call.1} parent=1 // loop_header_branch
      %25 = sbr.rel (%p23) target = $region8
    $region5: #{tpu_custom_call.1} parent=1 // loop_body
      %s27 = ssub.s32 %s22, 1
      %s28 = ssub.s32 %s22, 2
      %s35 = sadd.s32 1, %s30
      %p36 = scmp.ge.s32.totalorder %s35, 1
      %s37 = scalar_select %p36, 0, %s35
      %s38 = sadd.s32 1, %s29
      %s39 = scalar_select %p36, %s38, %s29
      %p40 = scmp.ge.s32.totalorder %s39, 2
      %s41 = scalar_select %p40, 0, %s39
      %s42 = ssub.s32 %s29, %s41
      %p43 = scmp.eq.s32.totalorder %s42, 0
      %s45 = sadd.s32 %s44, 1
      %s46 = scalar_select %p43, %s44, %s45
      %p49 = pneg %p43
      %p50 = scmp.eq.s32.totalorder %s22, 1
      %p51 = por %p49, %p50
      %p52 = scmp.ne.s32.totalorder %s44, %s47
      %p53 = scmp.eq.s32.totalorder %s22, 0
      %p54 = por %p52, %p53
      %p55 = scmp.ne.s32.totalorder %s44, %s47
      %p56 = scmp.eq.s32.totalorder %s27, 1
      %p57 = por %p55, %p56
      %p58 = scmp.ne.s32.totalorder %s47, %s48
      %p59 = scmp.eq.s32.totalorder %s27, 0
      %p60 = por %p58, %p59
      %p61 = scmp.ne.s32.totalorder %s47, %s48
      %p62 = scmp.eq.s32.totalorder %s28, 1
      %p63 = por %p61, %p62
      %p65 = scmp.ne.s32.totalorder %s48, %s64
      %p66 = scmp.eq.s32.totalorder %s28, 0
      %p67 = por %p65, %p66
      %s68 = ssub.s32 %s30, %s37
      %p69 = scmp.eq.s32.totalorder %s68, 0
      %s71 = sadd.s32 %s70, 1
      %s72 = scalar_select %p69, %s70, %s71
      %p75 = pneg %p69
      %p76 = scmp.eq.s32.totalorder %s22, 1
      %p77 = por %p75, %p76
      %p78 = scmp.ne.s32.totalorder %s70, %s73
      %p79 = scmp.eq.s32.totalorder %s22, 0
      %p80 = por %p78, %p79
      %p81 = scmp.ne.s32.totalorder %s70, %s73
      %p82 = scmp.eq.s32.totalorder %s27, 1
      %p83 = por %p81, %p82
      %p84 = scmp.ne.s32.totalorder %s73, %s74
      %p85 = scmp.eq.s32.totalorder %s27, 0
      %p86 = por %p84, %p85
      %p87 = scmp.ne.s32.totalorder %s73, %s74
      %p88 = scmp.eq.s32.totalorder %s28, 1
      %p89 = por %p87, %p88
      %p91 = scmp.ne.s32.totalorder %s74, %s90
      %p92 = scmp.eq.s32.totalorder %s28, 0
      %p93 = por %p91, %p92
      %s94 = ssub.s32 %s30, %s37
      %p95 = scmp.eq.s32.totalorder %s94, 0
      %s97 = sadd.s32 %s96, 1
      %s98 = scalar_select %p95, %s96, %s97
      %p101 = pneg %p95
      %p102 = scmp.eq.s32.totalorder %s22, 1
      %p103 = por %p101, %p102
      %p104 = scmp.ne.s32.totalorder %s96, %s99
      %p105 = scmp.eq.s32.totalorder %s22, 0
      %p106 = por %p104, %p105
      %p107 = scmp.ne.s32.totalorder %s96, %s99
      %p108 = scmp.eq.s32.totalorder %s27, 1
      %p109 = por %p107, %p108
      %p110 = scmp.ne.s32.totalorder %s99, %s100
      %p111 = scmp.eq.s32.totalorder %s27, 0
      %p112 = por %p110, %p111
      %p113 = scmp.ne.s32.totalorder %s99, %s100
      %p114 = scmp.eq.s32.totalorder %s28, 1
      %p115 = por %p113, %p114
      %p117 = scmp.ne.s32.totalorder %s100, %s116
      %p118 = scmp.eq.s32.totalorder %s28, 0
      %p119 = por %p117, %p118
      %s120 = ssub.s32 %s30, %s37
      %p121 = scmp.eq.s32.totalorder %s120, 0
      %s123 = sadd.s32 %s122, 1
      %s124 = scalar_select %p121, %s122, %s123
      %p127 = pneg %p121
      %p128 = scmp.eq.s32.totalorder %s22, 1
      %p129 = por %p127, %p128
      %p130 = scmp.ne.s32.totalorder %s122, %s125
      %p131 = scmp.eq.s32.totalorder %s22, 0
      %p132 = por %p130, %p131
      %p133 = scmp.ne.s32.totalorder %s122, %s125
      %p134 = scmp.eq.s32.totalorder %s27, 1
      %p135 = por %p133, %p134
      %p136 = scmp.ne.s32.totalorder %s125, %s126
      %p137 = scmp.eq.s32.totalorder %s27, 0
      %p138 = por %p136, %p137
      %p139 = scmp.ne.s32.totalorder %s125, %s126
      %p140 = scmp.eq.s32.totalorder %s28, 1
      %p141 = por %p139, %p140
      %p143 = scmp.ne.s32.totalorder %s126, %s142
      %p144 = scmp.eq.s32.totalorder %s28, 0
      %p145 = por %p143, %p144
      %s146 = ssub.s32 %s30, %s37
      %p147 = scmp.eq.s32.totalorder %s146, 0
      %s149 = sadd.s32 %s148, 1
      %s150 = scalar_select %p147, %s148, %s149
      %p153 = pneg %p147
      %p154 = scmp.eq.s32.totalorder %s22, 1
      %p155 = por %p153, %p154
      %p156 = scmp.ne.s32.totalorder %s148, %s151
      %p157 = scmp.eq.s32.totalorder %s22, 0
      %p158 = por %p156, %p157
      %p159 = scmp.ne.s32.totalorder %s148, %s151
      %p160 = scmp.eq.s32.totalorder %s27, 1
      %p161 = por %p159, %p160
      %p162 = scmp.ne.s32.totalorder %s151, %s152
      %p163 = scmp.eq.s32.totalorder %s27, 0
      %p164 = por %p162, %p163
      %p165 = scmp.ne.s32.totalorder %s151, %s152
      %p166 = scmp.eq.s32.totalorder %s28, 1
      %p167 = por %p165, %p166
      %p169 = scmp.ne.s32.totalorder %s152, %s168
      %p170 = scmp.eq.s32.totalorder %s28, 0
      %p171 = por %p169, %p170
      %s172 = ssub.s32 %s29, %s41
      %p173 = scmp.eq.s32.totalorder %s172, 0
      %s175 = sadd.s32 %s174, 1
      %s176 = scalar_select %p173, %s174, %s175
      %p179 = pneg %p173
      %p180 = scmp.eq.s32.totalorder %s22, 1
      %p181 = por %p179, %p180
      %p182 = scmp.ne.s32.totalorder %s174, %s177
      %p183 = scmp.eq.s32.totalorder %s22, 0
      %p184 = por %p182, %p183
      %p185 = scmp.ne.s32.totalorder %s174, %s177
      %p186 = scmp.eq.s32.totalorder %s27, 1
      %p187 = por %p185, %p186
      %p188 = scmp.ne.s32.totalorder %s177, %s178
      %p189 = scmp.eq.s32.totalorder %s27, 0
      %p190 = por %p188, %p189
      %p191 = scmp.ne.s32.totalorder %s177, %s178
      %p192 = scmp.eq.s32.totalorder %s28, 1
      %p193 = por %p191, %p192
      %p195 = scmp.ne.s32.totalorder %s178, %s194
      %p196 = scmp.eq.s32.totalorder %s28, 0
      %p197 = por %p195, %p196
      %s199 = sadd.s32 %s198, 1
      %p202 = scmp.eq.s32.totalorder %s22, 1
      %p203 = scmp.ne.s32.totalorder %s198, %s200
      %p204 = scmp.eq.s32.totalorder %s22, 0
      %p205 = por %p203, %p204
      %p206 = scmp.ne.s32.totalorder %s198, %s200
      %p207 = scmp.eq.s32.totalorder %s27, 1
      %p208 = por %p206, %p207
      %p209 = scmp.ne.s32.totalorder %s200, %s201
      %p210 = scmp.eq.s32.totalorder %s27, 0
      %p211 = por %p209, %p210
      %p212 = scmp.ne.s32.totalorder %s200, %s201
      %p213 = scmp.eq.s32.totalorder %s28, 1
      %p214 = por %p212, %p213
      %p216 = scmp.ne.s32.totalorder %s201, %s215
      %p217 = scmp.eq.s32.totalorder %s28, 0
      %p218 = por %p216, %p217
      %s220 = sadd.s32 %s219, 1
      %p223 = scmp.eq.s32.totalorder %s22, 1
      %p224 = scmp.ne.s32.totalorder %s219, %s221
      %p225 = scmp.eq.s32.totalorder %s22, 0
      %p226 = por %p224, %p225
      %p227 = scmp.ne.s32.totalorder %s219, %s221
      %p228 = scmp.eq.s32.totalorder %s27, 1
      %p229 = por %p227, %p228
      %p230 = scmp.ne.s32.totalorder %s221, %s222
      %p231 = scmp.eq.s32.totalorder %s27, 0
      %p232 = por %p230, %p231
      %p233 = scmp.ne.s32.totalorder %s221, %s222
      %p234 = scmp.eq.s32.totalorder %s28, 1
      %p235 = por %p233, %p234
      %p237 = scmp.ne.s32.totalorder %s222, %s236
      %p238 = scmp.eq.s32.totalorder %s28, 0
      %p239 = por %p237, %p238
      %s241 = sadd.s32 %s240, 1
      %p244 = scmp.eq.s32.totalorder %s22, 1
      %p245 = scmp.ne.s32.totalorder %s240, %s242
      %p246 = scmp.eq.s32.totalorder %s22, 0
      %p247 = por %p245, %p246
      %p248 = scmp.ne.s32.totalorder %s240, %s242
      %p249 = scmp.eq.s32.totalorder %s27, 1
      %p250 = por %p248, %p249
      %p251 = scmp.ne.s32.totalorder %s242, %s243
      %p252 = scmp.eq.s32.totalorder %s27, 0
      %p253 = por %p251, %p252
      %p254 = scmp.ne.s32.totalorder %s242, %s243
      %p255 = scmp.eq.s32.totalorder %s28, 1
      %p256 = por %p254, %p255
      %p258 = scmp.ne.s32.totalorder %s243, %s257
      %p259 = scmp.eq.s32.totalorder %s28, 0
      %p260 = por %p258, %p259
      %s261 = ssub.s32 %s29, %s41
      %p262 = scmp.eq.s32.totalorder %s261, 0
      %s264 = sadd.s32 %s263, 1
      %s265 = scalar_select %p262, %s263, %s264
      %p268 = pneg %p262
      %p269 = scmp.eq.s32.totalorder %s22, 1
      %p270 = por %p268, %p269
      %p271 = scmp.ne.s32.totalorder %s263, %s266
      %p272 = scmp.eq.s32.totalorder %s22, 0
      %p273 = por %p271, %p272
      %p274 = scmp.ne.s32.totalorder %s263, %s266
      %p275 = scmp.eq.s32.totalorder %s27, 1
      %p276 = por %p274, %p275
      %p277 = scmp.ne.s32.totalorder %s266, %s267
      %p278 = scmp.eq.s32.totalorder %s27, 0
      %p279 = por %p277, %p278
      %p280 = scmp.ne.s32.totalorder %s266, %s267
      %p281 = scmp.eq.s32.totalorder %s28, 1
      %p282 = por %p280, %p281
      %p284 = scmp.ne.s32.totalorder %s267, %s283
      %p285 = scmp.eq.s32.totalorder %s28, 0
      %p286 = por %p284, %p285
      %p287 = scmp.le.s32.totalorder 1, %s22
      %p288 = scmp.lt.s32.totalorder %s22, 3
      %p289 = pnand %p287, %p288
      %p290 = pneg %p289
      // Predicated region
      $region9: #{tpu_custom_call.1} parent=5 // pred_check
        _
      $region10: #{tpu_custom_call.1} parent=5 // pred_check_branch
        %292 = sbr.rel (%p289) target = $region12
      $region11: #{tpu_custom_call.1} parent=5 // pred_region
        %s293 = ssub.s32 %s22, 1
        // Predicated region
        $region13: #{tpu_custom_call.1} parent=11 // pred_check
          %p294 = pneg %p86
        $region14: #{tpu_custom_call.1} parent=11 // pred_check_branch
          %296 = sbr.rel (%p294) target = $region16
        $region15: #{tpu_custom_call.1} parent=11 // pred_region
          %s297 = smul.u32 2, %s32
          %p298 = scmp.lt.s32.totalorder %s297, 1
          %s299 = scalar_select %p298, %s297, 1
          %s300 = smul.addr %s299, 4
          %s301 = scalar_lea.vmem %s1, %s300
          %s302 = smul.u32 2, %s32
        $region16: #{tpu_custom_call.1} parent=11 // pred_fallthru
          _
        // Predicated region
        $region17: #{tpu_custom_call.1} parent=11 // pred_check
          %p303 = pneg %p112
        $region18: #{tpu_custom_call.1} parent=11 // pred_check_branch
          %305 = sbr.rel (%p303) target = $region20
        $region19: #{tpu_custom_call.1} parent=11 // pred_region
          %s306 = smul.u32 2, %s32
          %308 = vsyncadd [#allocation7], 0
          %s309 = scalar_lea.hbm %s2, %s306
          %s311 = sshll.u32 %s309, 4
          %s312 = int_to_ptr.hbm [resolvable:$true] %s311
          %s313 = sshll.u32 [#allocation6], 4
          %s314 = int_to_ptr.vmem [resolvable:$true] %s313
          %316 = dma.hbm_to_vmem [thread:$0]  %s312, 32, %s314, [#allocation7]
        $region20: #{tpu_custom_call.1} parent=11 // pred_fallthru
          _
        // Predicated region
        $region21: #{tpu_custom_call.1} parent=11 // pred_check
          %p317 = pneg %p138
        $region22: #{tpu_custom_call.1} parent=11 // pred_check_branch
          %319 = sbr.rel (%p317) target = $region24
        $region23: #{tpu_custom_call.1} parent=11 // pred_region
          %p320 = scmp.lt.s32.totalorder %s32, 0
          %s321 = scalar_select %p320, %s32, 0
          %s322 = smul.addr %s321, 32
          %s323 = smul.addr %s322, 4
          %s324 = scalar_lea.vmem %s3, %s323
        $region24: #{tpu_custom_call.1} parent=11 // pred_fallthru
          _
        // Predicated region
        $region25: #{tpu_custom_call.1} parent=11 // pred_check
          %p325 = pneg %p164
        $region26: #{tpu_custom_call.1} parent=11 // pred_check_branch
          %327 = sbr.rel (%p325) target = $region28
        $region27: #{tpu_custom_call.1} parent=11 // pred_region
          %p328 = scmp.lt.s32.totalorder %s32, 0
          %s329 = scalar_select %p328, %s32, 0
          %s330 = scalar_lea.vmem %s4, %s329
        $region28: #{tpu_custom_call.1} parent=11 // pred_fallthru
          _
        // Predicated region
        $region29: #{tpu_custom_call.1} parent=11 // pred_check
          %p331 = pneg %p211
        $region30: #{tpu_custom_call.1} parent=11 // pred_check_branch
          %333 = sbr.rel (%p331) target = $region32
        $region31: #{tpu_custom_call.1} parent=11 // pred_region
          _
        $region32: #{tpu_custom_call.1} parent=11 // pred_fallthru
          _
        // Predicated region
        $region33: #{tpu_custom_call.1} parent=11 // pred_check
          %p334 = pneg %p232
        $region34: #{tpu_custom_call.1} parent=11 // pred_check_branch
          %336 = sbr.rel (%p334) target = $region36
        $region35: #{tpu_custom_call.1} parent=11 // pred_region
          _
        $region36: #{tpu_custom_call.1} parent=11 // pred_fallthru
          _
        // Predicated region
        $region37: #{tpu_custom_call.1} parent=11 // pred_check
          %p337 = pneg %p253
        $region38: #{tpu_custom_call.1} parent=11 // pred_check_branch
          %339 = sbr.rel (%p337) target = $region40
        $region39: #{tpu_custom_call.1} parent=11 // pred_region
          %341 = vsyncadd [#allocation7], 0
          %s342 = sshll.u32 %s8, 4
          %s343 = int_to_ptr.hbm [resolvable:$true] %s342
          %s344 = sshll.u32 [#allocation8], 4
          %s345 = int_to_ptr.vmem [resolvable:$true] %s344
          %350 = dma.hbm_to_vmem [thread:$0]  %s343, 2048, %s345, [#allocation7], 128, 128, 8
        $region40: #{tpu_custom_call.1} parent=11 // pred_fallthru
          _
      $region12: #{tpu_custom_call.1} parent=5 // pred_fallthru
        _
      %p351 = scmp.lt.s32.totalorder %s22, 2
      // Predicated region
      $region41: #{tpu_custom_call.1} parent=5 // pred_check
        %p352 = pneg %p351
      $region42: #{tpu_custom_call.1} parent=5 // pred_check_branch
        %354 = sbr.rel (%p352) target = $region44
      $region43: #{tpu_custom_call.1} parent=5 // pred_region
        // Predicated region
        $region45: #{tpu_custom_call.1} parent=43 // pred_check
          %p355 = pneg %p54
        $region46: #{tpu_custom_call.1} parent=43 // pred_check_branch
          %357 = sbr.rel (%p355) target = $region48
        $region47: #{tpu_custom_call.1} parent=43 // pred_region
          %s358 = sand.u32 %s44, 1
          %s359 = scalar_lea.sflag [#allocation4], %s358
          %s360 = sand.u32 %s44, 1
          %s361 = smul.addr %s360, 8
          %s362 = scalar_lea.vmem [#allocation3], %s361
          %s363 = smul.u32 2, %s29
          %365 = vsyncadd %s359, 0
          %s366 = smul.addr %s363, 4
          %s367 = scalar_lea.hbm %s0, %s366
          %s368 = sshll.u32 %s367, 4
          %s369 = int_to_ptr.hbm [resolvable:$true] %s368
          %s370 = sshll.u32 %s362, 4
          %s371 = int_to_ptr.vmem [resolvable:$true] %s370
          %376 = dma.hbm_to_vmem [thread:$0]  %s369, 128, %s371, %s359, 64, 64, 4
        $region48: #{tpu_custom_call.1} parent=43 // pred_fallthru
          _
        // Predicated region
        $region49: #{tpu_custom_call.1} parent=43 // pred_check
          %p377 = pneg %p184
        $region50: #{tpu_custom_call.1} parent=43 // pred_check_branch
          %379 = sbr.rel (%p377) target = $region52
        $region51: #{tpu_custom_call.1} parent=43 // pred_region
          %s380 = smul.u32 2, %s29
          %p381 = scmp.lt.s32.totalorder %s380, 3
          %s382 = scalar_select %p381, %s380, 3
          %s383 = smul.addr %s382, 8
          %s384 = scalar_lea.vmem %s5, %s383
          %s385 = smul.u32 2, %s29
        $region52: #{tpu_custom_call.1} parent=43 // pred_fallthru
          _
      $region44: #{tpu_custom_call.1} parent=5 // pred_fallthru
        _
      %p386 = scmp.le.s32.totalorder 1, %s22
      %p387 = scmp.lt.s32.totalorder %s22, 3
      %p388 = pnand %p386, %p387
      %p389 = pneg %p388
      // Predicated region
      $region53: #{tpu_custom_call.1} parent=5 // pred_check
        _
      $region54: #{tpu_custom_call.1} parent=5 // pred_check_branch
        %391 = sbr.rel (%p388) target = $region56
      $region55: #{tpu_custom_call.1} parent=5 // pred_region
        %s392 = ssub.s32 %s22, 1
        %s393 = sand.u32 %s47, 1
        %s394 = scalar_lea.sflag [#allocation4], %s393
        %s395 = sand.u32 %s47, 1
        %s396 = smul.addr %s395, 8
        %s397 = scalar_lea.vmem [#allocation3], %s396
        // Predicated region
        $region57: #{tpu_custom_call.1} parent=55 // pred_check
          %p398 = pneg %p60
        $region58: #{tpu_custom_call.1} parent=55 // pred_check_branch
          %400 = sbr.rel (%p398) target = $region60
        $region59: #{tpu_custom_call.1} parent=55 // pred_region
          %402 = dma.done %s394, 128
        $region60: #{tpu_custom_call.1} parent=55 // pred_fallthru
          _
        // Predicated region
        $region61: #{tpu_custom_call.1} parent=55 // pred_check
          %p403 = pneg %p112
        $region62: #{tpu_custom_call.1} parent=55 // pred_check_branch
          %405 = sbr.rel (%p403) target = $region64
        $region63: #{tpu_custom_call.1} parent=55 // pred_region
          %407 = dma.done [#allocation7], 32
        $region64: #{tpu_custom_call.1} parent=55 // pred_fallthru
          _
        // Predicated region
        $region65: #{tpu_custom_call.1} parent=55 // pred_check
          %p408 = pneg %p253
        $region66: #{tpu_custom_call.1} parent=55 // pred_check_branch
          %410 = sbr.rel (%p408) target = $region68
        $region67: #{tpu_custom_call.1} parent=55 // pred_region
          %412 = dma.done [#allocation7], 2048
        $region68: #{tpu_custom_call.1} parent=55 // pred_fallthru
          _
        %s413 = sand.u32 %s47, 1
        %s414 = scalar_lea.sflag [#allocation4], %s413
        %s415 = sand.u32 %s47, 1
        %s416 = smul.addr %s415, 8
        %s417 = scalar_lea.vmem [#allocation3], %s416
        %p418 = pneg %p60
        %p419 = pneg %p57
        %s420 = smul.u32 2, %s32
        %p421 = scmp.lt.s32.totalorder %s420, 1
        %s422 = scalar_select %p421, %s420, 1
        %s423 = smul.addr %s422, 4
        %s424 = scalar_lea.vmem %s1, %s423
        %p425 = pneg %p86
        %p426 = pneg %p83
        %p427 = pneg %p112
        %p428 = pneg %p109
        %p429 = scmp.lt.s32.totalorder %s32, 0
        %s430 = scalar_select %p429, %s32, 0
        %s431 = smul.addr %s430, 32
        %s432 = smul.addr %s431, 4
        %s433 = scalar_lea.vmem %s3, %s432
        %p434 = pneg %p138
        %p435 = pneg %p135
        %p436 = scmp.lt.s32.totalorder %s32, 0
        %s437 = scalar_select %p436, %s32, 0
        %s438 = scalar_lea.vmem %s4, %s437
        %p439 = pneg %p164
        %p440 = pneg %p161
        %s441 = smul.u32 2, %s31
        %p442 = scmp.lt.s32.totalorder %s441, 3
        %s443 = scalar_select %p442, %s441, 3
        %s444 = smul.addr %s443, 8
        %s445 = scalar_lea.vmem %s5, %s444
        %p446 = pneg %p190
        %p447 = pneg %p187
        %p448 = pneg %p211
        %p449 = pneg %p208
        %p450 = pneg %p232
        %p451 = pneg %p229
        %p452 = pneg %p253
        %p453 = pneg %p250
        %p454 = pneg %p279
        %p455 = pneg %p276
        %s456 = sand.u32 %s266, 1
        %s457 = scalar_lea.sflag [#allocation5], %s456
        %s458 = sand.u32 %s266, 1
        %s459 = smul.addr %s458, 16
        %s460 = scalar_lea.vmem [#allocation9], %s459
        %s461 = smul.u32 2, %s31
        %s462 = smul.u32 2, %s32
        %p463 = scmp.lt.s32.totalorder %s462, 1
        %s464 = scalar_select %p463, %s462, 1
        %s465 = smul.addr %s464, 4
        %s466 = scalar_lea.vmem %s1, %s465
        %s467 = smul.u32 2, %s32
        %s468 = smul.u32 2, %s32
        %p469 = scmp.lt.s32.totalorder %s32, 0
        %s470 = scalar_select %p469, %s32, 0
        %s471 = smul.addr %s470, 32
        %s472 = smul.addr %s471, 4
        %s473 = scalar_lea.vmem %s3, %s472
        %p474 = scmp.lt.s32.totalorder %s32, 0
        %s475 = scalar_select %p474, %s32, 0
        %s476 = scalar_lea.vmem %s4, %s475
        %s477 = smul.u32 2, %s31
        %p478 = scmp.lt.s32.totalorder %s477, 3
        %s479 = scalar_select %p478, %s477, 3
        %s480 = smul.addr %s479, 8
        %s481 = scalar_lea.vmem %s5, %s480
        %s482 = smul.u32 2, %s31
        %s483 = smul.u32 2, %s31
        %p485 = scmp.eq.s32.totalorder %s32, 0
        // Predicated region
        $region69: #{tpu_custom_call.1} parent=55 // pred_check
          %p486 = pneg %p485
        $region70: #{tpu_custom_call.1} parent=55 // pred_check_branch
          %488 = sbr.rel (%p486) target = $region72
        $region71: #{tpu_custom_call.1} parent=55 // pred_region
          %489 = vst [vmem:[#allocation2] sm:$0xff] 0.0
          %490 = vst [vmem:[#allocation2 + $0x8] sm:$0xff] 0.0
        $region72: #{tpu_custom_call.1} parent=55 // pred_fallthru
          _
        %v491 = vld [vmem:[%s397] sm:$0xf]
        %v492 = vld [vmem:[%s397 + $0x4] sm:$0xf]
        %v493 = vld [vmem:[%s466] sm:$0xff]
        %v494 = vld [vmem:[%s466 + $0x8] sm:$0xff]
        %v495 = vld [vmem:[%s466 + $0x10] sm:$0xff]
        %v496 = vld [vmem:[%s466 + $0x18] sm:$0xff]
        %v497 = vld [vmem:[#allocation6] sm:$0x3]
        %v499 = vperm.slane %v497, 0
        %v500 = vperm.slane %v497, 1
        %v505 = vunpack.c.l.b16 %v491
        %v506 = vunpack.c.l.b16 %v492
        %v507 = vpack.c.b16 %v506, %v505
        %v512 = vunpack.c.l.b16 %v493
        %v513 = vunpack.c.h.b16 %v493
        %v514 = vunpack.c.l.b16 %v494
        %v515 = vunpack.c.h.b16 %v494
        %v516 = vunpack.c.l.b16 %v495
        %v517 = vunpack.c.h.b16 %v495
        %v518 = vunpack.c.l.b16 %v496
        %v519 = vunpack.c.h.b16 %v496
        %v520 = vpack.c.b16 %v514, %v512
        %v521 = vpack.c.b16 %v515, %v513
        %v522 = vpack.c.b16 %v518, %v516
        %v523 = vpack.c.b16 %v519, %v517
        %vm528 = vcmask 261120
        %v530 = vsel %vm528, %v507, 0
        %532 = vmatpush.bf16.msra.mxu0 0
        %533 = vmatpush.bf16.msra.mxu0 0
        %534 = vmatpush.bf16.msra.mxu0 0
        %535 = vmatpush.bf16.msra.mxu0 0
        %536 = vmatpush.bf16.msra.mxu0 0
        %537 = vmatpush.bf16.msra.mxu0 0
        %538 = vmatpush.bf16.msra.mxu0 %v522
        %539 = vmatpush.bf16.msra.mxu0 %v520
        %540 = vmatmul.bf16.gmra.mxu0 %v530
        %v541 = vpop.f32.mrf.mxu0
        %v542 = vadd.f32 %v499, %v541
        %v543 = vpop.f32.mrf.mxu0
        %v544 = vadd.f32 %v499, %v543
        %545 = vdwg.mxu0
        %546 = vmatpush.bf16.msra.mxu0 0
        %547 = vmatpush.bf16.msra.mxu0 0
        %548 = vmatpush.bf16.msra.mxu0 0
        %549 = vmatpush.bf16.msra.mxu0 0
        %550 = vmatpush.bf16.msra.mxu0 0
        %551 = vmatpush.bf16.msra.mxu0 0
        %552 = vmatpush.bf16.msra.mxu0 %v523
        %553 = vmatpush.bf16.msra.mxu0 %v521
        %554 = vmatmul.bf16.gmra.mxu0 %v530
        %v555 = vpop.f32.mrf.mxu0
        %v556 = vadd.f32 %v500, %v555
        %v557 = vpop.f32.mrf.mxu0
        %v558 = vadd.f32 %v500, %v557
        %559 = vdwg.mxu0
        %v560 = vmax.f32 %v542, 0.0
        %v561 = vmax.f32 %v556, 0.0
        %v562 = vmax.f32 %v544, 0.0
        %v563 = vmax.f32 %v558, 0.0
        %v564 = vpack.c.bf16 %v562, %v560
        %v565 = vpack.c.bf16 %v563, %v561
        %v566 = vld [vmem:[%s473] sm:$0xf]
        %v567 = vld [vmem:[%s473 + $0x4] sm:$0xf]
        %v568 = vld [vmem:[%s473 + $0x8] sm:$0xf]
        %v569 = vld [vmem:[%s473 + $0xc] sm:$0xf]
        %v570 = vld [vmem:[%s473 + $0x10] sm:$0xf]
        %v571 = vld [vmem:[%s473 + $0x14] sm:$0xf]
        %v572 = vld [vmem:[%s473 + $0x18] sm:$0xf]
        %v573 = vld [vmem:[%s473 + $0x1c] sm:$0xf]
        %v574 = vld [vmem:[%s473 + $0x20] sm:$0xf]
        %v575 = vld [vmem:[%s473 + $0x24] sm:$0xf]
        %v576 = vld [vmem:[%s473 + $0x28] sm:$0xf]
        %v577 = vld [vmem:[%s473 + $0x2c] sm:$0xf]
        %v578 = vld [vmem:[%s473 + $0x30] sm:$0xf]
        %v579 = vld [vmem:[%s473 + $0x34] sm:$0xf]
        %v580 = vld [vmem:[%s473 + $0x38] sm:$0xf]
        %v581 = vld [vmem:[%s473 + $0x3c] sm:$0xf]
        %v582 = vld [vmem:[%s473 + $0x40] sm:$0xf]
        %v583 = vld [vmem:[%s473 + $0x44] sm:$0xf]
        %v584 = vld [vmem:[%s473 + $0x48] sm:$0xf]
        %v585 = vld [vmem:[%s473 + $0x4c] sm:$0xf]
        %v586 = vld [vmem:[%s473 + $0x50] sm:$0xf]
        %v587 = vld [vmem:[%s473 + $0x54] sm:$0xf]
        %v588 = vld [vmem:[%s473 + $0x58] sm:$0xf]
        %v589 = vld [vmem:[%s473 + $0x5c] sm:$0xf]
        %v590 = vld [vmem:[%s473 + $0x60] sm:$0xf]
        %v591 = vld [vmem:[%s473 + $0x64] sm:$0xf]
        %v592 = vld [vmem:[%s473 + $0x68] sm:$0xf]
        %v593 = vld [vmem:[%s473 + $0x6c] sm:$0xf]
        %v594 = vld [vmem:[%s473 + $0x70] sm:$0xf]
        %v595 = vld [vmem:[%s473 + $0x74] sm:$0xf]
        %v596 = vld [vmem:[%s473 + $0x78] sm:$0xf]
        %v597 = vld [vmem:[%s473 + $0x7c] sm:$0xf]
        %v598 = vld [vmem:[%s476] sm:$0x1]
        %v600 = vperm.slane %v598, 0
        %v634 = vunpack.c.l.b16 %v566
        %v635 = vunpack.c.l.b16 %v567
        %v636 = vunpack.c.l.b16 %v568
        %v637 = vunpack.c.l.b16 %v569
        %v638 = vunpack.c.l.b16 %v570
        %v639 = vunpack.c.l.b16 %v571
        %v640 = vunpack.c.l.b16 %v572
        %v641 = vunpack.c.l.b16 %v573
        %v642 = vunpack.c.l.b16 %v574
        %v643 = vunpack.c.l.b16 %v575
        %v644 = vunpack.c.l.b16 %v576
        %v645 = vunpack.c.l.b16 %v577
        %v646 = vunpack.c.l.b16 %v578
        %v647 = vunpack.c.l.b16 %v579
        %v648 = vunpack.c.l.b16 %v580
        %v649 = vunpack.c.l.b16 %v581
        %v650 = vunpack.c.l.b16 %v582
        %v651 = vunpack.c.l.b16 %v583
        %v652 = vunpack.c.l.b16 %v584
        %v653 = vunpack.c.l.b16 %v585
        %v654 = vunpack.c.l.b16 %v586
        %v655 = vunpack.c.l.b16 %v587
        %v656 = vunpack.c.l.b16 %v588
        %v657 = vunpack.c.l.b16 %v589
        %v658 = vunpack.c.l.b16 %v590
        %v659 = vunpack.c.l.b16 %v591
        %v660 = vunpack.c.l.b16 %v592
        %v661 = vunpack.c.l.b16 %v593
        %v662 = vunpack.c.l.b16 %v594
        %v663 = vunpack.c.l.b16 %v595
        %v664 = vunpack.c.l.b16 %v596
        %v665 = vunpack.c.l.b16 %v597
        %v666 = vpack.c.b16 %v635, %v634
        %v667 = vpack.c.b16 %v637, %v636
        %v668 = vpack.c.b16 %v639, %v638
        %v669 = vpack.c.b16 %v641, %v640
        %v670 = vpack.c.b16 %v643, %v642
        %v671 = vpack.c.b16 %v645, %v644
        %v672 = vpack.c.b16 %v647, %v646
        %v673 = vpack.c.b16 %v649, %v648
        %v674 = vpack.c.b16 %v651, %v650
        %v675 = vpack.c.b16 %v653, %v652
        %v676 = vpack.c.b16 %v655, %v654
        %v677 = vpack.c.b16 %v657, %v656
        %v678 = vpack.c.b16 %v659, %v658
        %v679 = vpack.c.b16 %v661, %v660
        %v680 = vpack.c.b16 %v663, %v662
        %v681 = vpack.c.b16 %v665, %v664
        %698 = vmatpush.bf16.msra.mxu0 %v673
        %699 = vmatpush.bf16.msra.mxu0 %v672
        %700 = vmatpush.bf16.msra.mxu0 %v671
        %701 = vmatpush.bf16.msra.mxu0 %v670
        %702 = vmatpush.bf16.msra.mxu0 %v669
        %703 = vmatpush.bf16.msra.mxu0 %v668
        %704 = vmatpush.bf16.msra.mxu0 %v667
        %705 = vmatpush.bf16.msra.mxu0 %v666
        %706 = vmatmul.bf16.gmra.mxu0 %v564
        %v707 = vpop.f32.mrf.mxu0
        %v708 = vadd.f32 %v600, %v707
        %v709 = vpop.f32.mrf.mxu0
        %v710 = vadd.f32 %v600, %v709
        %711 = vdwg.mxu0
        %712 = vmatpush.bf16.msra.mxu0 %v681
        %713 = vmatpush.bf16.msra.mxu0 %v680
        %714 = vmatpush.bf16.msra.mxu0 %v679
        %715 = vmatpush.bf16.msra.mxu0 %v678
        %716 = vmatpush.bf16.msra.mxu0 %v677
        %717 = vmatpush.bf16.msra.mxu0 %v676
        %718 = vmatpush.bf16.msra.mxu0 %v675
        %719 = vmatpush.bf16.msra.mxu0 %v674
        %720 = vmatmul.bf16.gmra.mxu0 %v565
        %v721 = vpop.f32.mrf.mxu0
        %v722 = vadd.f32 %v708, %v721
        %v723 = vpop.f32.mrf.mxu0
        %v724 = vadd.f32 %v710, %v723
        %725 = vdwg.mxu0
        %728 = vrot.lane.b32.xlu0 %v722, 112
        %v729 = vpop.permute.xlu0 %728
        %730 = vrot.lane.b32.xlu0 %v724, 112
        %v731 = vpop.permute.xlu0 %730
        %734 = vrot.lane.b32.xlu0 %v722, 96
        %v735 = vpop.permute.xlu0 %734
        %736 = vrot.lane.b32.xlu0 %v724, 96
        %v737 = vpop.permute.xlu0 %736
        %740 = vrot.lane.b32.xlu0 %v722, 80
        %v741 = vpop.permute.xlu0 %740
        %742 = vrot.lane.b32.xlu0 %v724, 80
        %v743 = vpop.permute.xlu0 %742
        %746 = vrot.lane.b32.xlu0 %v722, 64
        %v747 = vpop.permute.xlu0 %746
        %748 = vrot.lane.b32.xlu0 %v724, 64
        %v749 = vpop.permute.xlu0 %748
        %752 = vrot.lane.b32.xlu0 %v722, 48
        %v753 = vpop.permute.xlu0 %752
        %754 = vrot.lane.b32.xlu0 %v724, 48
        %v755 = vpop.permute.xlu0 %754
        %758 = vrot.lane.b32.xlu0 %v722, 32
        %v759 = vpop.permute.xlu0 %758
        %760 = vrot.lane.b32.xlu0 %v724, 32
        %v761 = vpop.permute.xlu0 %760
        %764 = vrot.lane.b32.xlu0 %v722, 16
        %v765 = vpop.permute.xlu0 %764
        %766 = vrot.lane.b32.xlu0 %v724, 16
        %v767 = vpop.permute.xlu0 %766
        %v770 = vrot.slane %v735, 4
        %vm771 = vcmask 1047556
        %v772 = vsel %vm771, %v770, %v722
        %v773 = vrot.slane %v722, 4
        %v774 = vsel %vm771, %v735, %v773
        %v776 = vunpack.c.l.s4 1983009808
        %v777 = vunpack.c.0.s8 %v776
        %v778 = vperm.slane %v772, %v777
        %v780 = vunpack.c.l.s4 1983009808
        %v781 = vunpack.c.0.s8 %v780
        %v782 = vperm.slane %v774, %v781
        %v783 = vrot.slane %v741, 4
        %v784 = vsel %vm771, %v783, %v729
        %v785 = vrot.slane %v729, 4
        %v786 = vsel %vm771, %v741, %v785
        %v788 = vunpack.c.l.s4 1983009808
        %v789 = vunpack.c.0.s8 %v788
        %v790 = vperm.slane %v784, %v789
        %v792 = vunpack.c.l.s4 1983009808
        %v793 = vunpack.c.0.s8 %v792
        %v794 = vperm.slane %v786, %v793
        %v795 = vrot.slane %v759, 4
        %v796 = vsel %vm771, %v795, %v747
        %v797 = vrot.slane %v747, 4
        %v798 = vsel %vm771, %v759, %v797
        %v800 = vunpack.c.l.s4 1983009808
        %v801 = vunpack.c.0.s8 %v800
        %v802 = vperm.slane %v796, %v801
        %v804 = vunpack.c.l.s4 1983009808
        %v805 = vunpack.c.0.s8 %v804
        %v806 = vperm.slane %v798, %v805
        %v807 = vrot.slane %v765, 4
        %v808 = vsel %vm771, %v807, %v753
        %v809 = vrot.slane %v753, 4
        %v810 = vsel %vm771, %v765, %v809
        %v812 = vunpack.c.l.s4 1983009808
        %v813 = vunpack.c.0.s8 %v812
        %v814 = vperm.slane %v808, %v813
        %v816 = vunpack.c.l.s4 1983009808
        %v817 = vunpack.c.0.s8 %v816
        %v818 = vperm.slane %v810, %v817
        %v819 = vrot.slane %v790, 4
        %v820 = vsel %vm771, %v819, %v778
        %v821 = vrot.slane %v778, 4
        %v822 = vsel %vm771, %v790, %v821
        %v824 = vunpack.c.l.s4 1934713408
        %v825 = vunpack.c.0.s8 %v824
        %v826 = vperm.slane %v820, %v825
        %v828 = vunpack.c.l.s4 1934713408
        %v829 = vunpack.c.0.s8 %v828
        %v830 = vperm.slane %v822, %v829
        %v831 = vrot.slane %v794, 4
        %v832 = vsel %vm771, %v831, %v782
        %v833 = vrot.slane %v782, 4
        %v834 = vsel %vm771, %v794, %v833
        %v836 = vunpack.c.l.s4 1934713408
        %v837 = vunpack.c.0.s8 %v836
        %v838 = vperm.slane %v832, %v837
        %v840 = vunpack.c.l.s4 1934713408
        %v841 = vunpack.c.0.s8 %v840
        %v842 = vperm.slane %v834, %v841
        %v843 = vrot.slane %v814, 4
        %v844 = vsel %vm771, %v843, %v802
        %v845 = vrot.slane %v802, 4
        %v846 = vsel %vm771, %v814, %v845
        %v848 = vunpack.c.l.s4 1934713408
        %v849 = vunpack.c.0.s8 %v848
        %v850 = vperm.slane %v844, %v849
        %v852 = vunpack.c.l.s4 1934713408
        %v853 = vunpack.c.0.s8 %v852
        %v854 = vperm.slane %v846, %v853
        %v855 = vrot.slane %v818, 4
        %v856 = vsel %vm771, %v855, %v806
        %v857 = vrot.slane %v806, 4
        %v858 = vsel %vm771, %v818, %v857
        %v860 = vunpack.c.l.s4 1934713408
        %v861 = vunpack.c.0.s8 %v860
        %v862 = vperm.slane %v856, %v861
        %v864 = vunpack.c.l.s4 1934713408
        %v865 = vunpack.c.0.s8 %v864
        %v866 = vperm.slane %v858, %v865
        %v867 = vrot.slane %v850, 4
        %v868 = vsel %vm771, %v867, %v826
        %v869 = vrot.slane %v826, 4
        %v870 = vsel %vm771, %v850, %v869
        %v871 = vrot.slane %v854, 4
        %v872 = vsel %vm771, %v871, %v830
        %v873 = vrot.slane %v830, 4
        %v874 = vsel %vm771, %v854, %v873
        %v875 = vrot.slane %v862, 4
        %v876 = vsel %vm771, %v875, %v838
        %v877 = vrot.slane %v838, 4
        %v878 = vsel %vm771, %v862, %v877
        %v879 = vrot.slane %v866, 4
        %v880 = vsel %vm771, %v879, %v842
        %v881 = vrot.slane %v842, 4
        %v882 = vsel %vm771, %v866, %v881
        %v883 = vrot.slane %v737, 4
        %v884 = vsel %vm771, %v883, %v724
        %v885 = vrot.slane %v724, 4
        %v886 = vsel %vm771, %v737, %v885
        %v888 = vunpack.c.l.s4 1983009808
        %v889 = vunpack.c.0.s8 %v888
        %v890 = vperm.slane %v884, %v889
        %v892 = vunpack.c.l.s4 1983009808
        %v893 = vunpack.c.0.s8 %v892
        %v894 = vperm.slane %v886, %v893
        %v895 = vrot.slane %v743, 4
        %v896 = vsel %vm771, %v895, %v731
        %v897 = vrot.slane %v731, 4
        %v898 = vsel %vm771, %v743, %v897
        %v900 = vunpack.c.l.s4 1983009808
        %v901 = vunpack.c.0.s8 %v900
        %v902 = vperm.slane %v896, %v901
        %v904 = vunpack.c.l.s4 1983009808
        %v905 = vunpack.c.0.s8 %v904
        %v906 = vperm.slane %v898, %v905
        %v907 = vrot.slane %v761, 4
        %v908 = vsel %vm771, %v907, %v749
        %v909 = vrot.slane %v749, 4
        %v910 = vsel %vm771, %v761, %v909
        %v912 = vunpack.c.l.s4 1983009808
        %v913 = vunpack.c.0.s8 %v912
        %v914 = vperm.slane %v908, %v913
        %v916 = vunpack.c.l.s4 1983009808
        %v917 = vunpack.c.0.s8 %v916
        %v918 = vperm.slane %v910, %v917
        %v919 = vrot.slane %v767, 4
        %v920 = vsel %vm771, %v919, %v755
        %v921 = vrot.slane %v755, 4
        %v922 = vsel %vm771, %v767, %v921
        %v924 = vunpack.c.l.s4 1983009808
        %v925 = vunpack.c.0.s8 %v924
        %v926 = vperm.slane %v920, %v925
        %v928 = vunpack.c.l.s4 1983009808
        %v929 = vunpack.c.0.s8 %v928
        %v930 = vperm.slane %v922, %v929
        %v931 = vrot.slane %v902, 4
        %v932 = vsel %vm771, %v931, %v890
        %v933 = vrot.slane %v890, 4
        %v934 = vsel %vm771, %v902, %v933
        %v936 = vunpack.c.l.s4 1934713408
        %v937 = vunpack.c.0.s8 %v936
        %v938 = vperm.slane %v932, %v937
        %v940 = vunpack.c.l.s4 1934713408
        %v941 = vunpack.c.0.s8 %v940
        %v942 = vperm.slane %v934, %v941
        %v943 = vrot.slane %v906, 4
        %v944 = vsel %vm771, %v943, %v894
        %v945 = vrot.slane %v894, 4
        %v946 = vsel %vm771, %v906, %v945
        %v948 = vunpack.c.l.s4 1934713408
        %v949 = vunpack.c.0.s8 %v948
        %v950 = vperm.slane %v944, %v949
        %v952 = vunpack.c.l.s4 1934713408
        %v953 = vunpack.c.0.s8 %v952
        %v954 = vperm.slane %v946, %v953
        %v955 = vrot.slane %v926, 4
        %v956 = vsel %vm771, %v955, %v914
        %v957 = vrot.slane %v914, 4
        %v958 = vsel %vm771, %v926, %v957
        %v960 = vunpack.c.l.s4 1934713408
        %v961 = vunpack.c.0.s8 %v960
        %v962 = vperm.slane %v956, %v961
        %v964 = vunpack.c.l.s4 1934713408
        %v965 = vunpack.c.0.s8 %v964
        %v966 = vperm.slane %v958, %v965
        %v967 = vrot.slane %v930, 4
        %v968 = vsel %vm771, %v967, %v918
        %v969 = vrot.slane %v918, 4
        %v970 = vsel %vm771, %v930, %v969
        %v972 = vunpack.c.l.s4 1934713408
        %v973 = vunpack.c.0.s8 %v972
        %v974 = vperm.slane %v968, %v973
        %v976 = vunpack.c.l.s4 1934713408
        %v977 = vunpack.c.0.s8 %v976
        %v978 = vperm.slane %v970, %v977
        %v979 = vrot.slane %v962, 4
        %v980 = vsel %vm771, %v979, %v938
        %v981 = vrot.slane %v938, 4
        %v982 = vsel %vm771, %v962, %v981
        %v983 = vrot.slane %v966, 4
        %v984 = vsel %vm771, %v983, %v942
        %v985 = vrot.slane %v942, 4
        %v986 = vsel %vm771, %v966, %v985
        %v987 = vrot.slane %v974, 4
        %v988 = vsel %vm771, %v987, %v950
        %v989 = vrot.slane %v950, 4
        %v990 = vsel %vm771, %v974, %v989
        %v991 = vrot.slane %v978, 4
        %v992 = vsel %vm771, %v991, %v954
        %v993 = vrot.slane %v954, 4
        %v994 = vsel %vm771, %v978, %v993
        %vm995 = vcmask 130048
        %v996 = vsel %vm995, %v868, -inf
        %997 = vmax.xlane.f32.xlu0 %v996
        %v998 = vpop.xlane.xlu0 %997
        %v999 = vsel %vm995, %v870, -inf
        %1000 = vmax.xlane.f32.xlu0 %v999
        %v1001 = vpop.xlane.xlu0 %1000
        %v1002 = vsel %vm995, %v872, -inf
        %1003 = vmax.xlane.f32.xlu0 %v1002
        %v1004 = vpop.xlane.xlu0 %1003
        %v1005 = vsel %vm995, %v874, -inf
        %1006 = vmax.xlane.f32.xlu0 %v1005
        %v1007 = vpop.xlane.xlu0 %1006
        %v1008 = vsel %vm995, %v876, -inf
        %1009 = vmax.xlane.f32.xlu0 %v1008
        %v1010 = vpop.xlane.xlu0 %1009
        %v1011 = vsel %vm995, %v878, -inf
        %1012 = vmax.xlane.f32.xlu0 %v1011
        %v1013 = vpop.xlane.xlu0 %1012
        %v1014 = vsel %vm995, %v880, -inf
        %1015 = vmax.xlane.f32.xlu0 %v1014
        %v1016 = vpop.xlane.xlu0 %1015
        %v1017 = vsel %vm995, %v882, -inf
        %1018 = vmax.xlane.f32.xlu0 %v1017
        %v1019 = vpop.xlane.xlu0 %1018
        %v1020 = vsel %vm995, %v980, -inf
        %1021 = vmax.xlane.f32.xlu0 %v1020
        %v1022 = vpop.xlane.xlu0 %1021
        %v1023 = vsel %vm995, %v982, -inf
        %1024 = vmax.xlane.f32.xlu0 %v1023
        %v1025 = vpop.xlane.xlu0 %1024
        %v1026 = vsel %vm995, %v984, -inf
        %1027 = vmax.xlane.f32.xlu0 %v1026
        %v1028 = vpop.xlane.xlu0 %1027
        %v1029 = vsel %vm995, %v986, -inf
        %1030 = vmax.xlane.f32.xlu0 %v1029
        %v1031 = vpop.xlane.xlu0 %1030
        %v1032 = vsel %vm995, %v988, -inf
        %1033 = vmax.xlane.f32.xlu0 %v1032
        %v1034 = vpop.xlane.xlu0 %1033
        %v1035 = vsel %vm995, %v990, -inf
        %1036 = vmax.xlane.f32.xlu0 %v1035
        %v1037 = vpop.xlane.xlu0 %1036
        %v1038 = vsel %vm995, %v992, -inf
        %1039 = vmax.xlane.f32.xlu0 %v1038
        %v1040 = vpop.xlane.xlu0 %1039
        %v1041 = vsel %vm995, %v994, -inf
        %1042 = vmax.xlane.f32.xlu0 %v1041
        %v1043 = vpop.xlane.xlu0 %1042
        %v1044 = vld [vmem:[%s6] sm:$0xff]
        %v1061 = vlaneseq
        %v1062 = vand.u32 %v1061, 127
        %v1063 = vperm.slane %v998, %v1062
        %v1064 = vperm.slane %v1001, %v1062
        %v1065 = vperm.slane %v1004, %v1062
        %v1066 = vperm.slane %v1007, %v1062
        %v1067 = vperm.slane %v1010, %v1062
        %v1068 = vperm.slane %v1013, %v1062
        %v1069 = vperm.slane %v1016, %v1062
        %v1070 = vperm.slane %v1019, %v1062
        %v1071 = vperm.slane %v1022, %v1062
        %v1072 = vperm.slane %v1025, %v1062
        %v1073 = vperm.slane %v1028, %v1062
        %v1074 = vperm.slane %v1031, %v1062
        %v1075 = vperm.slane %v1034, %v1062
        %v1076 = vperm.slane %v1037, %v1062
        %v1077 = vperm.slane %v1040, %v1062
        %v1078 = vperm.slane %v1043, %v1062
        %vm1079 = vcmask 1041409
        %v1080 = vsel %vm1079, %v1064, %v1063
        %vm1081 = vcmask 1042434
        %v1082 = vsel %vm1081, %v1065, %v1080
        %vm1083 = vcmask 1043459
        %v1084 = vsel %vm1083, %v1066, %v1082
        %vm1085 = vcmask 1044484
        %v1086 = vsel %vm1085, %v1067, %v1084
        %vm1087 = vcmask 1045509
        %v1088 = vsel %vm1087, %v1068, %v1086
        %vm1089 = vcmask 1046534
        %v1090 = vsel %vm1089, %v1069, %v1088
        %vm1091 = vcmask 1047559
        %v1092 = vsel %vm1091, %v1070, %v1090
        %v1093 = vsel %vm1079, %v1072, %v1071
        %v1094 = vsel %vm1081, %v1073, %v1093
        %v1095 = vsel %vm1083, %v1074, %v1094
        %v1096 = vsel %vm1085, %v1075, %v1095
        %v1097 = vsel %vm1087, %v1076, %v1096
        %v1098 = vsel %vm1089, %v1077, %v1097
        %v1099 = vsel %vm1091, %v1078, %v1098
        %vm1100 = vcmask 64512
        %v1101 = vsel %vm1100, %v1092, 0
        %v1103 = vsel %vm1100, %v1099, 0
        %1105 = vmatpush.msra.mxu0 0.0
        %1106 = vmatpush.msra.mxu0 0.0
        %1107 = vmatpush.msra.mxu0 0.0
        %1108 = vmatpush.msra.mxu0 0.0
        %1109 = vmatpush.msra.mxu0 0.0
        %1110 = vmatpush.msra.mxu0 0.0
        %1111 = vmatpush.msra.mxu0 0.0
        %1112 = vmatpush.msra.mxu0 0.0
        %1113 = vmatpush.msra.mxu0 0.0
        %1114 = vmatpush.msra.mxu0 0.0
        %1115 = vmatpush.msra.mxu0 0.0
        %1116 = vmatpush.msra.mxu0 0.0
        %1117 = vmatpush.msra.mxu0 0.0
        %1118 = vmatpush.msra.mxu0 0.0
        %1119 = vmatpush.msra.mxu0 0.0
        %1120 = vmatpush.msra.mxu0 %v1044
        %1121 = vmatmul.f32.gmra.mxu0 %v1101
        %v1122 = vpop.f32.mrf.mxu0
        %v1123 = vadd.f32 0.0, %v1122
        %1124 = vmatmul.f32.gmra.mxu0 %v1103
        %v1125 = vpop.f32.mrf.mxu0
        %v1126 = vadd.f32 0.0, %v1125
        %1127 = vdwg.mxu0
        %v1128 = vsub.f32 %v722, %v1123
        %v1129 = vsub.f32 %v724, %v1126
        %v1130 = vmul.f32 %v1128, 1.442695
        %v1131 = vpow.pop %v1130
        %v1132 = vmul.f32 %v1129, 1.442695
        %v1133 = vpow.pop %v1132
        %v1134 = vld [vmem:[%s7] sm:$0xff]
        %v1135 = vld [vmem:[%s7 + $0x8] sm:$0xff]
        %v1136 = vld [vmem:[%s7 + $0x10] sm:$0xff]
        %v1137 = vld [vmem:[%s7 + $0x18] sm:$0xff]
        %v1138 = vld [vmem:[%s7 + $0x20] sm:$0xff]
        %v1139 = vld [vmem:[%s7 + $0x28] sm:$0xff]
        %v1140 = vld [vmem:[%s7 + $0x30] sm:$0xff]
        %v1141 = vld [vmem:[%s7 + $0x38] sm:$0xff]
        %v1142 = vld [vmem:[%s7 + $0x40] sm:$0xff]
        %v1143 = vld [vmem:[%s7 + $0x48] sm:$0xff]
        %v1144 = vld [vmem:[%s7 + $0x50] sm:$0xff]
        %v1145 = vld [vmem:[%s7 + $0x58] sm:$0xff]
        %v1146 = vld [vmem:[%s7 + $0x60] sm:$0xff]
        %v1147 = vld [vmem:[%s7 + $0x68] sm:$0xff]
        %v1148 = vld [vmem:[%s7 + $0x70] sm:$0xff]
        %v1149 = vld [vmem:[%s7 + $0x78] sm:$0xff]
        %1150 = vmatpush.msra.mxu0 %v1149
        %1151 = vmatpush.msra.mxu0 %v1148
        %1152 = vmatpush.msra.mxu0 %v1147
        %1153 = vmatpush.msra.mxu0 %v1146
        %1154 = vmatpush.msra.mxu0 %v1145
        %1155 = vmatpush.msra.mxu0 %v1144
        %1156 = vmatpush.msra.mxu0 %v1143
        %1157 = vmatpush.msra.mxu0 %v1142
        %1158 = vmatpush.msra.mxu0 %v1141
        %1159 = vmatpush.msra.mxu0 %v1140
        %1160 = vmatpush.msra.mxu0 %v1139
        %1161 = vmatpush.msra.mxu0 %v1138
        %1162 = vmatpush.msra.mxu0 %v1137
        %1163 = vmatpush.msra.mxu0 %v1136
        %1164 = vmatpush.msra.mxu0 %v1135
        %1165 = vmatpush.msra.mxu0 %v1134
        %1166 = vmatmul.f32.gmra.mxu0 %v1131
        %v1167 = vpop.f32.mrf.mxu0
        %v1168 = vadd.f32 0.0, %v1167
        %1169 = vmatmul.f32.gmra.mxu0 %v1133
        %v1170 = vpop.f32.mrf.mxu0
        %v1171 = vadd.f32 0.0, %v1170
        %1172 = vdwg.mxu0
        %v1173 = vld [vmem:[%s481] sm:$0xff]
        %v1174 = vld [vmem:[%s481 + $0x8] sm:$0xff]
        %v1175 = vrcp.pop %v1168
        %v1176 = vrcp.pop %v1171
        %v1177 = vmul.f32 %v1173, %v1175
        %v1178 = vmul.f32 %v1174, %v1176
        %v1180 = vsel %vm1100, %v1177, 0
        %v1183 = vsel %vm1100, %v1178, 0
        %1185 = vmatpush.msra.mxu0 0.0
        %1186 = vmatpush.msra.mxu0 0.0
        %1187 = vmatpush.msra.mxu0 0.0
        %1188 = vmatpush.msra.mxu0 0.0
        %1189 = vmatpush.msra.mxu0 0.0
        %1190 = vmatpush.msra.mxu0 0.0
        %1191 = vmatpush.msra.mxu0 0.0
        %1192 = vmatpush.msra.mxu0 0.0
        %1193 = vmatpush.msra.mxu0 0.0
        %1194 = vmatpush.msra.mxu0 0.0
        %1195 = vmatpush.msra.mxu0 0.0
        %1196 = vmatpush.msra.mxu0 0.0
        %1197 = vmatpush.msra.mxu0 0.0
        %1198 = vmatpush.msra.mxu0 0.0
        %1199 = vmatpush.msra.mxu0 0.0
        %1200 = vmatpush.msra.mxu0 %v1044
        %1201 = vmatmul.f32.gmra.mxu0 %v1180
        %v1202 = vpop.f32.mrf.mxu0
        %v1203 = vadd.f32 0.0, %v1202
        %1204 = vmatmul.f32.gmra.mxu0 %v1183
        %v1205 = vpop.f32.mrf.mxu0
        %v1206 = vadd.f32 0.0, %v1205
        %1207 = vdwg.mxu0
        %v1208 = vmul.f32 %v1131, %v1203
        %v1209 = vmul.f32 %v1133, %v1206
        %v1210 = vld [vmem:[#allocation2] sm:$0xff]
        %v1211 = vld [vmem:[#allocation2 + $0x8] sm:$0xff]
        %v1212 = vld [vmem:[#allocation8] sm:$0xff]
        %v1213 = vld [vmem:[#allocation8 + $0x8] sm:$0xff]
        %v1214 = vld [vmem:[#allocation8 + $0x10] sm:$0xff]
        %v1215 = vld [vmem:[#allocation8 + $0x18] sm:$0xff]
        %v1216 = vld [vmem:[#allocation8 + $0x20] sm:$0xff]
        %v1217 = vld [vmem:[#allocation8 + $0x28] sm:$0xff]
        %v1218 = vld [vmem:[#allocation8 + $0x30] sm:$0xff]
        %v1219 = vld [vmem:[#allocation8 + $0x38] sm:$0xff]
        %v1220 = vld [vmem:[#allocation8 + $0x40] sm:$0xff]
        %v1221 = vld [vmem:[#allocation8 + $0x48] sm:$0xff]
        %v1222 = vld [vmem:[#allocation8 + $0x50] sm:$0xff]
        %v1223 = vld [vmem:[#allocation8 + $0x58] sm:$0xff]
        %v1224 = vld [vmem:[#allocation8 + $0x60] sm:$0xff]
        %v1225 = vld [vmem:[#allocation8 + $0x68] sm:$0xff]
        %v1226 = vld [vmem:[#allocation8 + $0x70] sm:$0xff]
        %v1227 = vld [vmem:[#allocation8 + $0x78] sm:$0xff]
        %1228 = vmatpush.msra.mxu0 %v1227
        %1229 = vmatpush.msra.mxu0 %v1226
        %1230 = vmatpush.msra.mxu0 %v1225
        %1231 = vmatpush.msra.mxu0 %v1224
        %1232 = vmatpush.msra.mxu0 %v1223
        %1233 = vmatpush.msra.mxu0 %v1222
        %1234 = vmatpush.msra.mxu0 %v1221
        %1235 = vmatpush.msra.mxu0 %v1220
        %1236 = vmatpush.msra.mxu0 %v1219
        %1237 = vmatpush.msra.mxu0 %v1218
        %1238 = vmatpush.msra.mxu0 %v1217
        %1239 = vmatpush.msra.mxu0 %v1216
        %1240 = vmatpush.msra.mxu0 %v1215
        %1241 = vmatpush.msra.mxu0 %v1214
        %1242 = vmatpush.msra.mxu0 %v1213
        %1243 = vmatpush.msra.mxu0 %v1212
        %1244 = vmatmul.f32.gmra.mxu0 %v1208
        %v1245 = vpop.f32.mrf.mxu0
        %v1246 = vadd.f32 0.0, %v1245
        %1247 = vmatmul.f32.gmra.mxu0 %v1209
        %v1248 = vpop.f32.mrf.mxu0
        %v1249 = vadd.f32 0.0, %v1248
        %1250 = vdwg.mxu0
        %v1251 = vadd.f32 %v1210, %v1246
        %v1252 = vadd.f32 %v1211, %v1249
        %1253 = vst [vmem:[#allocation2] sm:$0xff] %v1251
        %1254 = vst [vmem:[#allocation2 + $0x8] sm:$0xff] %v1252
        // Predicated region
        $region73: #{tpu_custom_call.1} parent=55 // pred_check
          %p1255 = pneg %p485
        $region74: #{tpu_custom_call.1} parent=55 // pred_check_branch
          %1257 = sbr.rel (%p1255) target = $region76
        $region75: #{tpu_custom_call.1} parent=55 // pred_region
          %v1258 = vld [vmem:[#allocation2] sm:$0xff]
          %v1259 = vld [vmem:[#allocation2 + $0x8] sm:$0xff]
          %1260 = vst [vmem:[%s460] sm:$0xff] %v1258
          %1261 = vst [vmem:[%s460 + $0x8] sm:$0xff] %v1259
        $region76: #{tpu_custom_call.1} parent=55 // pred_fallthru
          _
        %s1262 = sand.u32 %s266, 1
        %s1263 = scalar_lea.sflag [#allocation5], %s1262
        %s1264 = sand.u32 %s266, 1
        %s1265 = smul.addr %s1264, 16
        %s1266 = scalar_lea.vmem [#allocation9], %s1265
        // Predicated region
        $region77: #{tpu_custom_call.1} parent=55 // pred_check
          %p1267 = pneg %p276
        $region78: #{tpu_custom_call.1} parent=55 // pred_check_branch
          %1269 = sbr.rel (%p1267) target = $region80
        $region79: #{tpu_custom_call.1} parent=55 // pred_region
          %s1270 = smul.u32 2, %s31
          %1272 = vsyncadd %s1263, 0
          %s1273 = smul.addr %s1270, 8
          %s1274 = scalar_lea.hbm %s9, %s1273
          %s1275 = sshll.u32 %s1266, 4
          %s1276 = int_to_ptr.vmem [resolvable:$true] %s1275
          %s1277 = sshll.u32 %s1274, 4
          %s1278 = int_to_ptr.hbm [resolvable:$true] %s1277
          %1283 = dma.vmem_to_hbm [thread:$0]  %s1276, 256, %s1278, %s1263, 128, 128, 8
        $region80: #{tpu_custom_call.1} parent=55 // pred_fallthru
          _
      $region56: #{tpu_custom_call.1} parent=5 // pred_fallthru
        _
      %p1284 = scmp.le.s32.totalorder 2, %s22
      // Predicated region
      $region81: #{tpu_custom_call.1} parent=5 // pred_check
        %p1285 = pneg %p1284
      $region82: #{tpu_custom_call.1} parent=5 // pred_check_branch
        %1287 = sbr.rel (%p1285) target = $region84
      $region83: #{tpu_custom_call.1} parent=5 // pred_region
        %s1288 = ssub.s32 %s22, 2
        // Predicated region
        $region85: #{tpu_custom_call.1} parent=83 // pred_check
          %p1289 = pneg %p282
        $region86: #{tpu_custom_call.1} parent=83 // pred_check_branch
          %1291 = sbr.rel (%p1289) target = $region88
        $region87: #{tpu_custom_call.1} parent=83 // pred_region
          %s1292 = sand.u32 %s267, 1
          %s1293 = scalar_lea.sflag [#allocation5], %s1292
          %s1294 = sand.u32 %s267, 1
          %s1295 = smul.addr %s1294, 16
          %s1296 = scalar_lea.vmem [#allocation9], %s1295
          %1298 = dma.done %s1293, 256
        $region88: #{tpu_custom_call.1} parent=83 // pred_fallthru
          _
      $region84: #{tpu_custom_call.1} parent=5 // pred_fallthru
        _
    $region6: #{tpu_custom_call.1} parent=1 // loop_footer
      %s26 = sadd.s32 1, %s22
    $region7: #{tpu_custom_call.1} parent=1 // loop_footer_branch
      %21 = sbr.rel target = $region3
    $region8: #{tpu_custom_call.1} parent=1 // loop_exit
      _
    %1299 = vsyncpa [#allocation4], 1
    %s1300 = scalar_lea.sflag [#allocation4], 1
    %1301 = vsyncpa %s1300, 1
    %1302 = vsyncpa [#allocation7], 1
    %1303 = vsyncpa [#allocation5], 1
    %s1304 = scalar_lea.sflag [#allocation5], 1
    %1305 = vsyncpa %s1304, 1

</llo_original>
